<compile_context>
chip_gen: v5e
topology: v5e:2x2
jax: 0.10.0
libtpu: 0.0.40
codegen_flags: <defaults>
</compile_context>

<pallas_src>
import jax
import jax.numpy as jnp
from jax.experimental import pallas as pl
from jax.experimental.pallas import tpu as pltpu


def mlp_kernel(p_ref, x_ref, o_ref):
    # p_ref: SMEM f32[11] = [W1 (2,3) row-major, b1 (2,), W2 (1,2) row-major, b2 (1,)]
    # x_ref: VMEM f32[3, TB]   (features on sublanes, batch on lanes)
    # o_ref: VMEM f32[1, TB]
    x = x_ref[...]                      # (3, TB)
    x0 = x[0:1, :]                      # (1, TB)
    x1 = x[1:2, :]
    x2 = x[2:3, :]

    # hidden layer: h_j = relu(sum_k x_k * W1[j, k] + b1[j])   -- pure VPU FMAs
    w100, w101, w102 = p_ref[0], p_ref[1], p_ref[2]
    w110, w111, w112 = p_ref[3], p_ref[4], p_ref[5]
    b10, b11 = p_ref[6], p_ref[7]
    h0 = jnp.maximum(x0 * w100 + x1 * w101 + x2 * w102 + b10, 0.0)
    h1 = jnp.maximum(x0 * w110 + x1 * w111 + x2 * w112 + b11, 0.0)

    # output layer: o = h0 * W2[0,0] + h1 * W2[0,1] + b2[0]
    w200, w201, b20 = p_ref[8], p_ref[9], p_ref[10]
    o_ref[...] = h0 * w200 + h1 * w201 + b20


def mlp_forward(x, W1, b1, W2, b2, *, tb=512):
    """x: (B, 3) f32; W1: (2, 3); b1: (2,); W2: (1, 2); b2: (1,). Returns (B, 1)."""
    B = x.shape[0]
    # Pad batch up to a multiple of the lane tile (tb is a multiple of 128).
    bp = ((B + tb - 1) // tb) * tb
    x_t = jnp.zeros((3, bp), jnp.float32).at[:, :B].set(x.T.astype(jnp.float32))

    # All 11 parameters flattened into one SMEM-resident scalar table.
    params = jnp.concatenate(
        [W1.reshape(-1), b1.reshape(-1), W2.reshape(-1), b2.reshape(-1)]
    ).astype(jnp.float32)                                   # (11,)

    grid = (bp // tb,)
    out = pl.pallas_call(
        mlp_kernel,
        out_shape=jax.ShapeDtypeStruct((1, bp), jnp.float32),
        grid_spec=pltpu.PrefetchScalarGridSpec(
            num_scalar_prefetch=0,
            grid=grid,
            in_specs=[
                pl.BlockSpec(memory_space=pltpu.MemorySpace.SMEM),   # params (whole, SMEM)
                pl.BlockSpec((3, tb), lambda i: (0, i)),             # x tile (3, TB)
            ],
            out_specs=pl.BlockSpec((1, tb), lambda i: (0, i)),       # lane-dense output
        ),
        compiler_params=pltpu.CompilerParams(
            dimension_semantics=("parallel",)),
    )(params, x_t)

    return out[0, :B].reshape(B, 1)


def init_params(key):
    """Deterministic init mirroring nn.Linear shapes (PyTorch stores W as (out, in))."""
    k1, k2, k3, k4 = jax.random.split(key, 4)
    bound1 = 1.0 / jnp.sqrt(3.0)
    W1 = jax.random.uniform(k1, (2, 3), jnp.float32, -bound1, bound1)
    b1 = jax.random.uniform(k2, (2,), jnp.float32, -bound1, bound1)
    bound2 = 1.0 / jnp.sqrt(2.0)
    W2 = jax.random.uniform(k3, (1, 2), jnp.float32, -bound2, bound2)
    b2 = jax.random.uniform(k4, (1,), jnp.float32, -bound2, bound2)
    return W1, b1, W2, b2


if __name__ == "__main__":
    key = jax.random.PRNGKey(0)
    W1, b1, W2, b2 = init_params(key)

    # Batched version of the script's `x = torch.ones(3)`; B chosen so the
    # batch grid (TB=512) actually runs 2 pipelined/parallel steps.
    B = 1024
    x = jnp.ones((B, 3), dtype=jnp.float32)

    out = mlp_forward(x, W1, b1, W2, b2, tb=512)
    out = jax.block_until_ready(out)

    # Pure-JAX reference of the forward semantics.
    ref = jnp.maximum(x @ W1.T + b1, 0.0) @ W2.T + b2
    assert out.shape == (B, 1)
    assert jnp.allclose(out, ref, atol=1e-5), (out, ref)

    print("KERNEL_OK")
</pallas_src>

<mosaic_0001>
module attributes {stable_mosaic.version = 11 : i64} {
  func.func @mlp_kernel(%arg0: i32, %arg1: memref<11xf32, #tpu.memory_space<smem>>, %arg2: memref<3x512xf32, #tpu.memory_space<vmem>>, %arg3: memref<1x512xf32, #tpu.memory_space<vmem>>) attributes {dimension_semantics = [#tpu.dimension_semantics<parallel>], iteration_bounds = array<i64: 2>, scalar_prefetch = 0 : i64, scratch_operands = 0 : i64, tpu.core_type = #tpu.core_type<tc>, window_params = [{transform_indices = @transform_0, window_bounds = array<i64: 11>}, {transform_indices = @transform_1, window_bounds = array<i64: 3, 512>}, {transform_indices = @transform_2, window_bounds = array<i64: 1, 512>}]} {
    %c0 = arith.constant 0 : index
    %c0_0 = arith.constant 0 : index
    %0 = vector.load %arg2[%c0, %c0_0] : memref<3x512xf32, #tpu.memory_space<vmem>>, vector<3x512xf32>
    %1 = vector.extract_strided_slice %0 {offsets = [0, 0], sizes = [1, 512], strides = [1, 1]} : vector<3x512xf32> to vector<1x512xf32>
    %2 = vector.extract_strided_slice %0 {offsets = [1, 0], sizes = [1, 512], strides = [1, 1]} : vector<3x512xf32> to vector<1x512xf32>
    %3 = vector.extract_strided_slice %0 {offsets = [2, 0], sizes = [1, 512], strides = [1, 1]} : vector<3x512xf32> to vector<1x512xf32>
    %c0_1 = arith.constant 0 : index
    %4 = memref.load %arg1[%c0_1] : memref<11xf32, #tpu.memory_space<smem>>
    %c1 = arith.constant 1 : index
    %5 = memref.load %arg1[%c1] : memref<11xf32, #tpu.memory_space<smem>>
    %c2 = arith.constant 2 : index
    %6 = memref.load %arg1[%c2] : memref<11xf32, #tpu.memory_space<smem>>
    %c3 = arith.constant 3 : index
    %7 = memref.load %arg1[%c3] : memref<11xf32, #tpu.memory_space<smem>>
    %c4 = arith.constant 4 : index
    %8 = memref.load %arg1[%c4] : memref<11xf32, #tpu.memory_space<smem>>
    %c5 = arith.constant 5 : index
    %9 = memref.load %arg1[%c5] : memref<11xf32, #tpu.memory_space<smem>>
    %c6 = arith.constant 6 : index
    %10 = memref.load %arg1[%c6] : memref<11xf32, #tpu.memory_space<smem>>
    %c7 = arith.constant 7 : index
    %11 = memref.load %arg1[%c7] : memref<11xf32, #tpu.memory_space<smem>>
    %12 = vector.broadcast %4 : f32 to vector<1x512xf32>
    %13 = arith.mulf %1, %12 : vector<1x512xf32>
    %14 = vector.broadcast %5 : f32 to vector<1x512xf32>
    %15 = arith.mulf %2, %14 : vector<1x512xf32>
    %16 = arith.addf %13, %15 : vector<1x512xf32>
    %17 = vector.broadcast %6 : f32 to vector<1x512xf32>
    %18 = arith.mulf %3, %17 : vector<1x512xf32>
    %19 = arith.addf %16, %18 : vector<1x512xf32>
    %20 = vector.broadcast %10 : f32 to vector<1x512xf32>
    %21 = arith.addf %19, %20 : vector<1x512xf32>
    %cst = arith.constant 0.000000e+00 : f32
    %22 = vector.broadcast %cst : f32 to vector<1x512xf32>
    %23 = arith.maximumf %21, %22 : vector<1x512xf32>
    %24 = vector.broadcast %7 : f32 to vector<1x512xf32>
    %25 = arith.mulf %1, %24 : vector<1x512xf32>
    %26 = vector.broadcast %8 : f32 to vector<1x512xf32>
    %27 = arith.mulf %2, %26 : vector<1x512xf32>
    %28 = arith.addf %25, %27 : vector<1x512xf32>
    %29 = vector.broadcast %9 : f32 to vector<1x512xf32>
    %30 = arith.mulf %3, %29 : vector<1x512xf32>
    %31 = arith.addf %28, %30 : vector<1x512xf32>
    %32 = vector.broadcast %11 : f32 to vector<1x512xf32>
    %33 = arith.addf %31, %32 : vector<1x512xf32>
    %cst_2 = arith.constant 0.000000e+00 : f32
    %34 = vector.broadcast %cst_2 : f32 to vector<1x512xf32>
    %35 = arith.maximumf %33, %34 : vector<1x512xf32>
    %c8 = arith.constant 8 : index
    %36 = memref.load %arg1[%c8] : memref<11xf32, #tpu.memory_space<smem>>
    %c9 = arith.constant 9 : index
    %37 = memref.load %arg1[%c9] : memref<11xf32, #tpu.memory_space<smem>>
    %c10 = arith.constant 10 : index
    %38 = memref.load %arg1[%c10] : memref<11xf32, #tpu.memory_space<smem>>
    %39 = vector.broadcast %36 : f32 to vector<1x512xf32>
    %40 = arith.mulf %23, %39 : vector<1x512xf32>
    %41 = vector.broadcast %37 : f32 to vector<1x512xf32>
    %42 = arith.mulf %35, %41 : vector<1x512xf32>
    %43 = arith.addf %40, %42 : vector<1x512xf32>
    %44 = vector.broadcast %38 : f32 to vector<1x512xf32>
    %45 = arith.addf %43, %44 : vector<1x512xf32>
    %c0_3 = arith.constant 0 : index
    %c0_4 = arith.constant 0 : index
    %46 = vector.load %arg3[%c0_3, %c0_4] : memref<1x512xf32, #tpu.memory_space<vmem>>, vector<1x512xf32>
    tpu.vector_store %arg3[%c0_3, %c0_4], %45 {strides = array<i32>} : memref<1x512xf32, #tpu.memory_space<vmem>>, vector<1x512xf32>,
    return
  }
  func.func @transform_0(%arg0: i32) -> i32 {
    %c0_i32 = arith.constant 0 : i32
    %c0_i32_0 = arith.constant 0 : i32
    return %c0_i32 : i32
  }
  func.func @transform_1(%arg0: i32) -> (i32, i32) {
    %c0_i32 = arith.constant 0 : i32
    %c0_i32_0 = arith.constant 0 : i32
    return %c0_i32, %arg0 : i32, i32
  }
  func.func @transform_2(%arg0: i32) -> (i32, i32) {
    %c0_i32 = arith.constant 0 : i32
    %c0_i32_0 = arith.constant 0 : i32
    return %c0_i32, %arg0 : i32, i32
  }
}

</mosaic_0001>

<llo_original>
// kernel: tpu_custom_call.1
$region0: #{tpu_custom_call.1}
  #allocation0 [shape = 'u32[]', space=smem, size = 0x4, offset = 0x4, fixed_abs, tag = 'smem constant byte address 0x4 - core index']
  #allocation1 [shape = 'u32[72,128]{1,0:T(1,128)}', space=vmem, size = 0x9000, scoped, tag = 'internal scratch']
  %s0 = inlined_call_operand.hbm [shape: f32[11], index: 0, kind: input, shape index: {}]
  %s1 = inlined_call_operand.hbm [shape: f32[3,1024], index: 1, kind: input, shape index: {}]
  %s2 = inlined_call_operand.hbm [shape: f32[1,1024], index: 2, kind: output, shape index: {}]
  %s3 = sld [smem:[#allocation0]]
  $region49: #{tpu_custom_call.1} parent=0
    _
  %s5 = ssub.s32 1, %s3
  %s6 = scalar_select 0, %s5, %s3
  $region1: #{tpu_custom_call.1} parent=0
    #allocation2 [shape = 'u8[512]{0}', space=smem, size = 0x200, scoped, tag = 'input window, operand 0, single buffered']
    #allocation3 [shape = 's32[2]{0}', space=sflag, size = 0x8, scoped, tag = 'scoped memory for tpu_custom_call.1']
    #allocation4 [shape = 's32[2]{0}', space=sflag, size = 0x8, scoped, tag = 'scoped memory for tpu_custom_call.1']
    #allocation5 [shape = 's32[2]{0}', space=sflag, size = 0x8, scoped, tag = 'scoped memory for tpu_custom_call.1']
    #allocation6 [shape = 'u8[16384]{0}', space=vmem, size = 0x4000, scoped, tag = 'input window, operand 1']
    #allocation7 [shape = 'u8[4096]{0}', space=vmem, size = 0x1000, scoped, tag = 'output window, operand 0']
    %7 = vsyncpa [#allocation5], 0
    %8 = vsyncpa [#allocation3], 0
    %s9 = scalar_lea.sflag [#allocation3], 1
    %10 = vsyncpa %s9, 0
    %11 = vsyncpa [#allocation4], 0
    %s12 = scalar_lea.sflag [#allocation4], 1
    %13 = vsyncpa %s12, 0
    loop: start=0, step=1, limit=4
    $region2: #{tpu_custom_call.1} parent=1 // loop_pre_header
      _
    $region3: #{tpu_custom_call.1} parent=1 // loop_header
      %s15 = sphi 0, %s19
      %p16 = scmp.ge.s32.totalorder %s15, 4
      %s23 = sphi 0, %s23
      %s25 = sphi 0, %s23
      %s26 = sphi 0, %s25
      %s40 = sphi 0, %s26
      %s46 = sphi 0, %s48
      %s49 = sphi 0, %s46
      %s50 = sphi 0, %s49
      %s66 = sphi 0, %s50
      %s72 = sphi 0, %s74
      %s75 = sphi 0, %s72
      %s76 = sphi 0, %s75
      %s92 = sphi 0, %s76
    $region4: #{tpu_custom_call.1} parent=1 // loop_header_branch
      %18 = sbr.rel (%p16) target = $region8
    $region5: #{tpu_custom_call.1} parent=1 // loop_body
      %s20 = ssub.s32 %s15, 1
      %s21 = ssub.s32 %s15, 2
      %s22 = sadd.s32 %s15, 1
      %s24 = sadd.s32 %s23, 1
      %p27 = scmp.eq.s32.totalorder %s15, 1
      %p28 = scmp.ne.s32.totalorder %s23, %s25
      %p29 = scmp.eq.s32.totalorder %s15, 0
      %p30 = por %p28, %p29
      %p31 = scmp.ne.s32.totalorder %s23, %s25
      %p32 = scmp.eq.s32.totalorder %s20, 1
      %p33 = por %p31, %p32
      %p34 = scmp.ne.s32.totalorder %s25, %s26
      %p35 = scmp.eq.s32.totalorder %s20, 0
      %p36 = por %p34, %p35
      %p37 = scmp.ne.s32.totalorder %s25, %s26
      %p38 = scmp.eq.s32.totalorder %s21, 1
      %p39 = por %p37, %p38
      %p41 = scmp.ne.s32.totalorder %s26, %s40
      %p42 = scmp.eq.s32.totalorder %s21, 0
      %p43 = por %p41, %p42
      %s44 = ssub.s32 %s15, %s22
      %p45 = scmp.eq.s32.totalorder %s44, 0
      %s47 = sadd.s32 %s46, 1
      %s48 = scalar_select %p45, %s46, %s47
      %p51 = pneg %p45
      %p52 = scmp.eq.s32.totalorder %s15, 1
      %p53 = por %p51, %p52
      %p54 = scmp.ne.s32.totalorder %s46, %s49
      %p55 = scmp.eq.s32.totalorder %s15, 0
      %p56 = por %p54, %p55
      %p57 = scmp.ne.s32.totalorder %s46, %s49
      %p58 = scmp.eq.s32.totalorder %s20, 1
      %p59 = por %p57, %p58
      %p60 = scmp.ne.s32.totalorder %s49, %s50
      %p61 = scmp.eq.s32.totalorder %s20, 0
      %p62 = por %p60, %p61
      %p63 = scmp.ne.s32.totalorder %s49, %s50
      %p64 = scmp.eq.s32.totalorder %s21, 1
      %p65 = por %p63, %p64
      %p67 = scmp.ne.s32.totalorder %s50, %s66
      %p68 = scmp.eq.s32.totalorder %s21, 0
      %p69 = por %p67, %p68
      %s70 = ssub.s32 %s15, %s22
      %p71 = scmp.eq.s32.totalorder %s70, 0
      %s73 = sadd.s32 %s72, 1
      %s74 = scalar_select %p71, %s72, %s73
      %p77 = pneg %p71
      %p78 = scmp.eq.s32.totalorder %s15, 1
      %p79 = por %p77, %p78
      %p80 = scmp.ne.s32.totalorder %s72, %s75
      %p81 = scmp.eq.s32.totalorder %s15, 0
      %p82 = por %p80, %p81
      %p83 = scmp.ne.s32.totalorder %s72, %s75
      %p84 = scmp.eq.s32.totalorder %s20, 1
      %p85 = por %p83, %p84
      %p86 = scmp.ne.s32.totalorder %s75, %s76
      %p87 = scmp.eq.s32.totalorder %s20, 0
      %p88 = por %p86, %p87
      %p89 = scmp.ne.s32.totalorder %s75, %s76
      %p90 = scmp.eq.s32.totalorder %s21, 1
      %p91 = por %p89, %p90
      %p93 = scmp.ne.s32.totalorder %s76, %s92
      %p94 = scmp.eq.s32.totalorder %s21, 0
      %p95 = por %p93, %p94
      %p96 = scmp.le.s32.totalorder 1, %s15
      %p97 = scmp.lt.s32.totalorder %s15, 3
      %p98 = pnand %p96, %p97
      %p99 = pneg %p98
      // Predicated region
      $region9: #{tpu_custom_call.1} parent=5 // pred_check
        _
      $region10: #{tpu_custom_call.1} parent=5 // pred_check_branch
        %101 = sbr.rel (%p98) target = $region12
      $region11: #{tpu_custom_call.1} parent=5 // pred_region
        %s102 = ssub.s32 %s15, 1
        // Predicated region
        $region13: #{tpu_custom_call.1} parent=11 // pred_check
          %p103 = pneg %p36
        $region14: #{tpu_custom_call.1} parent=11 // pred_check_branch
          %105 = sbr.rel (%p103) target = $region16
        $region15: #{tpu_custom_call.1} parent=11 // pred_region
          %107 = vsyncadd [#allocation5], 0
          %s109 = sshll.u32 %s0, 4
          %s110 = int_to_ptr.hbm [resolvable:$true] %s109
          %112 = dma.hbm_to_smem %s110, 16, [#allocation2], [#allocation5]
        $region16: #{tpu_custom_call.1} parent=11 // pred_fallthru
          _
      $region12: #{tpu_custom_call.1} parent=5 // pred_fallthru
        _
      %p113 = scmp.lt.s32.totalorder %s15, 2
      // Predicated region
      $region17: #{tpu_custom_call.1} parent=5 // pred_check
        %p114 = pneg %p113
      $region18: #{tpu_custom_call.1} parent=5 // pred_check_branch
        %116 = sbr.rel (%p114) target = $region20
      $region19: #{tpu_custom_call.1} parent=5 // pred_region
        // Predicated region
        $region21: #{tpu_custom_call.1} parent=19 // pred_check
          %p117 = pneg %p56
        $region22: #{tpu_custom_call.1} parent=19 // pred_check_branch
          %119 = sbr.rel (%p117) target = $region24
        $region23: #{tpu_custom_call.1} parent=19 // pred_region
          %s120 = sand.u32 %s46, 1
          %s121 = scalar_lea.sflag [#allocation3], %s120
          %s122 = sand.u32 %s46, 1
          %s123 = smul.addr %s122, 16
          %s124 = scalar_lea.vmem [#allocation6], %s123
          %s125 = smul.u32 4, %s15
          %127 = vsyncadd %s121, 0
          %s128 = smul.addr %s125, 4
          %s129 = scalar_lea.hbm %s1, %s128
          %s131 = sshll.u32 %s129, 4
          %s132 = int_to_ptr.hbm [resolvable:$true] %s131
          %s133 = sshll.u32 %s124, 4
          %s134 = int_to_ptr.vmem [resolvable:$true] %s133
          %136 = dma.hbm_to_vmem [thread:$0]  %s132, 256, %s134, %s121
        $region24: #{tpu_custom_call.1} parent=19 // pred_fallthru
          _
      $region20: #{tpu_custom_call.1} parent=5 // pred_fallthru
        _
      %p137 = scmp.le.s32.totalorder 1, %s15
      %p138 = scmp.lt.s32.totalorder %s15, 3
      %p139 = pnand %p137, %p138
      %p140 = pneg %p139
      // Predicated region
      $region25: #{tpu_custom_call.1} parent=5 // pred_check
        _
      $region26: #{tpu_custom_call.1} parent=5 // pred_check_branch
        %142 = sbr.rel (%p139) target = $region28
      $region27: #{tpu_custom_call.1} parent=5 // pred_region
        %s143 = ssub.s32 %s15, 1
        // Predicated region
        $region29: #{tpu_custom_call.1} parent=27 // pred_check
          %p144 = pneg %p36
        $region30: #{tpu_custom_call.1} parent=27 // pred_check_branch
          %146 = sbr.rel (%p144) target = $region32
        $region31: #{tpu_custom_call.1} parent=27 // pred_region
          %148 = dma.done [#allocation5], 16
        $region32: #{tpu_custom_call.1} parent=27 // pred_fallthru
          _
        %s149 = sand.u32 %s49, 1
        %s150 = scalar_lea.sflag [#allocation3], %s149
        %s151 = sand.u32 %s49, 1
        %s152 = smul.addr %s151, 16
        %s153 = scalar_lea.vmem [#allocation6], %s152
        // Predicated region
        $region33: #{tpu_custom_call.1} parent=27 // pred_check
          %p154 = pneg %p62
        $region34: #{tpu_custom_call.1} parent=27 // pred_check_branch
          %156 = sbr.rel (%p154) target = $region36
        $region35: #{tpu_custom_call.1} parent=27 // pred_region
          %158 = dma.done %s150, 256
        $region36: #{tpu_custom_call.1} parent=27 // pred_fallthru
          _
        %159 = sfence
        %p160 = pneg %p36
        %p161 = pneg %p33
        %s162 = sand.u32 %s49, 1
        %s163 = scalar_lea.sflag [#allocation3], %s162
        %s164 = sand.u32 %s49, 1
        %s165 = smul.addr %s164, 16
        %s166 = scalar_lea.vmem [#allocation6], %s165
        %p167 = pneg %p62
        %p168 = pneg %p59
        %p169 = pneg %p88
        %p170 = pneg %p85
        %s171 = sand.u32 %s75, 1
        %s172 = scalar_lea.sflag [#allocation4], %s171
        %s173 = sand.u32 %s75, 1
        %s174 = smul.addr %s173, 4
        %s175 = scalar_lea.vmem [#allocation7], %s174
        %s176 = smul.u32 4, %s20
        %s177 = smul.u32 4, %s20
        %v178 = vld [vmem:[%s153] sm:$0x77]
        %v179 = vld [vmem:[%s153 + $0x8] sm:$0x77]
        %s180 = sld [smem:[#allocation2]]
        %s181 = sld [smem:[#allocation2 + $0x1]]
        %s182 = sld [smem:[#allocation2 + $0x2]]
        %s183 = sld [smem:[#allocation2 + $0x3]]
        %s184 = sld [smem:[#allocation2 + $0x4]]
        %s185 = sld [smem:[#allocation2 + $0x5]]
        %s186 = sld [smem:[#allocation2 + $0x6]]
        %s187 = sld [smem:[#allocation2 + $0x7]]
        %v188 = vstv %s180
        %v189 = vmul.f32 %v178, %v188
        %v190 = vmul.f32 %v179, %v188
        %v191 = vstv %s181
        %v192 = vmul.f32 %v178, %v191
        %v193 = vmul.f32 %v179, %v191
        %v196 = vrot.slane %v192, 5
        %v197 = vrot.slane %v196, 4
        %v198 = vrot.slane %v193, 5
        %v199 = vrot.slane %v198, 4
        %v202 = vadd.f32 %v189, %v197
        %v203 = vadd.f32 %v190, %v199
        %v204 = vstv %s182
        %v205 = vmul.f32 %v178, %v204
        %v206 = vmul.f32 %v179, %v204
        %v209 = vrot.slane %v205, 6
        %v210 = vrot.slane %v209, 4
        %v211 = vrot.slane %v206, 6
        %v212 = vrot.slane %v211, 4
        %v215 = vadd.f32 %v202, %v210
        %v216 = vadd.f32 %v203, %v212
        %v217 = vstv %s186
        %v218 = vadd.f32 %v215, %v217
        %v219 = vadd.f32 %v216, %v217
        %v220 = vmax.f32 %v218, 0.0
        %v221 = vmax.f32 %v219, 0.0
        %v222 = vstv %s183
        %v223 = vmul.f32 %v178, %v222
        %v224 = vmul.f32 %v179, %v222
        %v225 = vstv %s184
        %v226 = vmul.f32 %v178, %v225
        %v227 = vmul.f32 %v179, %v225
        %v230 = vrot.slane %v226, 5
        %v231 = vrot.slane %v230, 4
        %v232 = vrot.slane %v227, 5
        %v233 = vrot.slane %v232, 4
        %v236 = vadd.f32 %v223, %v231
        %v237 = vadd.f32 %v224, %v233
        %v238 = vstv %s185
        %v239 = vmul.f32 %v178, %v238
        %v240 = vmul.f32 %v179, %v238
        %v243 = vrot.slane %v239, 6
        %v244 = vrot.slane %v243, 4
        %v245 = vrot.slane %v240, 6
        %v246 = vrot.slane %v245, 4
        %v249 = vadd.f32 %v236, %v244
        %v250 = vadd.f32 %v237, %v246
        %v251 = vstv %s187
        %v252 = vadd.f32 %v249, %v251
        %v253 = vadd.f32 %v250, %v251
        %v254 = vmax.f32 %v252, 0.0
        %v255 = vmax.f32 %v253, 0.0
        %s256 = sld [smem:[#allocation2 + $0x8]]
        %s257 = sld [smem:[#allocation2 + $0x9]]
        %s258 = sld [smem:[#allocation2 + $0xa]]
        %v259 = vstv %s256
        %v260 = vmul.f32 %v220, %v259
        %v261 = vmul.f32 %v221, %v259
        %v262 = vstv %s257
        %v263 = vmul.f32 %v254, %v262
        %v264 = vmul.f32 %v255, %v262
        %v265 = vadd.f32 %v260, %v263
        %v266 = vadd.f32 %v261, %v264
        %v267 = vstv %s258
        %v268 = vadd.f32 %v265, %v267
        %v269 = vadd.f32 %v266, %v267
        %v272 = vrot.slane %v268, 3
        %v273 = vrot.slane %v269, 6
        %v274 = vrot.slane %v269, 1
        %vm275 = vcmask 1040384
        %v276 = vsel %vm275, %v268, %v272
        %vm277 = vcmask 1042434
        %v278 = vsel %vm277, %v273, %v274
        %vm279 = vcmask 1041408
        %v280 = vsel %vm279, %v276, %v278
        %v282 = vlaneseq
        %vm283 = vcmp.ge.s32.totalorder %v282, 0
        %vm284 = vcmp.lt.s32.totalorder %v282, 512
        %vm285 = vmand %vm283, %vm284
        %286 = vst.msk [vmem:[%s175] sm:$0xf] %vm285, %v280
        %s287 = sand.u32 %s75, 1
        %s288 = scalar_lea.sflag [#allocation4], %s287
        %s289 = sand.u32 %s75, 1
        %s290 = smul.addr %s289, 4
        %s291 = scalar_lea.vmem [#allocation7], %s290
        // Predicated region
        $region37: #{tpu_custom_call.1} parent=27 // pred_check
          %p292 = pneg %p85
        $region38: #{tpu_custom_call.1} parent=27 // pred_check_branch
          %294 = sbr.rel (%p292) target = $region40
        $region39: #{tpu_custom_call.1} parent=27 // pred_region
          %s295 = smul.u32 4, %s20
          %297 = vsyncadd %s288, 0
          %s298 = scalar_lea.hbm %s2, %s295
          %s300 = sshll.u32 %s291, 4
          %s301 = int_to_ptr.vmem [resolvable:$true] %s300
          %s302 = sshll.u32 %s298, 4
          %s303 = int_to_ptr.hbm [resolvable:$true] %s302
          %305 = dma.vmem_to_hbm [thread:$0]  %s301, 64, %s303, %s288
        $region40: #{tpu_custom_call.1} parent=27 // pred_fallthru
          _
      $region28: #{tpu_custom_call.1} parent=5 // pred_fallthru
        _
      %p306 = scmp.le.s32.totalorder 2, %s15
      // Predicated region
      $region41: #{tpu_custom_call.1} parent=5 // pred_check
        %p307 = pneg %p306
      $region42: #{tpu_custom_call.1} parent=5 // pred_check_branch
        %309 = sbr.rel (%p307) target = $region44
      $region43: #{tpu_custom_call.1} parent=5 // pred_region
        %s310 = ssub.s32 %s15, 2
        // Predicated region
        $region45: #{tpu_custom_call.1} parent=43 // pred_check
          %p311 = pneg %p91
        $region46: #{tpu_custom_call.1} parent=43 // pred_check_branch
          %313 = sbr.rel (%p311) target = $region48
        $region47: #{tpu_custom_call.1} parent=43 // pred_region
          %s314 = sand.u32 %s76, 1
          %s315 = scalar_lea.sflag [#allocation4], %s314
          %s316 = sand.u32 %s76, 1
          %s317 = smul.addr %s316, 4
          %s318 = scalar_lea.vmem [#allocation7], %s317
          %320 = dma.done %s315, 64
        $region48: #{tpu_custom_call.1} parent=43 // pred_fallthru
          _
      $region44: #{tpu_custom_call.1} parent=5 // pred_fallthru
        _
    $region6: #{tpu_custom_call.1} parent=1 // loop_footer
      %s19 = sadd.s32 1, %s15
    $region7: #{tpu_custom_call.1} parent=1 // loop_footer_branch
      %14 = sbr.rel target = $region3
    $region8: #{tpu_custom_call.1} parent=1 // loop_exit
      _
    %321 = vsyncpa [#allocation3], 1
    %s322 = scalar_lea.sflag [#allocation3], 1
    %323 = vsyncpa %s322, 1
    %324 = vsyncpa [#allocation4], 1
    %s325 = scalar_lea.sflag [#allocation4], 1
    %326 = vsyncpa %s325, 1
    %327 = vsyncpa [#allocation5], 1
    %s328 = scalar_lea.sflag [#allocation5], 1
    %329 = vsyncpa %s328, 1

</llo_original>
